<compile_context>
chip_gen: v5e
topology: v5e:2x2
jax: 0.10.0
libtpu: 0.0.40
codegen_flags: <defaults>
</compile_context>

<pallas_src>
import jax
import jax.numpy as jnp
from jax.experimental import pallas as pl
from jax.experimental.pallas import tpu as pltpu

LN_EPS = 1e-5
SQRT_2_OVER_PI = 0.7978845608028654
GELU_C = 0.044715
INV_SQRT2 = 0.7071067811865476
VMEM_BUDGET = 48 * 1024 * 1024      # conservative vs v7x's 64 MiB physical VMEM


def _round_up(x, m):
    return ((x + m - 1) // m) * m


def multitask_head_kernel(x_ref, w1_ref, b1_ref, w2_ref, b2_ref, o_ref):
    # ---- LayerNorm statistics over the feature axis (f32) -----------------
    # (The gamma/beta affine is folded into w1/b1 by the wrapper — valid in
    #  eval mode since Dropout is identity.)
    x = x_ref[...].astype(jnp.float32)
    mean = jnp.mean(x, axis=-1, keepdims=True)
    cent = x - mean
    var = jnp.mean(cent * cent, axis=-1, keepdims=True)
    xn = cent * jax.lax.rsqrt(var + LN_EPS)

    # Dropout(p=0.5): identity in eval mode.

    # ---- Linear(F -> 512): bf16 MXU inputs, f32 accumulation ---------------
    h = jnp.dot(xn.astype(jnp.bfloat16), w1_ref[...],
                preferred_element_type=jnp.float32)
    h = h + b1_ref[...]

    # ---- GELU (tanh approximation; tanh goes to the EUP slot) --------------
    h = 0.5 * h * (1.0 + jnp.tanh(SQRT_2_OVER_PI * (h + GELU_C * h * h * h)))

    # Dropout(p=0.3): identity in eval mode.

    # ---- Linear(512 -> Cp): bf16 MXU inputs, f32 accumulation --------------
    out = jnp.dot(h.astype(jnp.bfloat16), w2_ref[...],
                  preferred_element_type=jnp.float32)
    out = out + b2_ref[...]

    o_ref[...] = out.astype(o_ref.dtype)


def _vmem_bytes(tb, F, H, Cp):
    x_tiles = 2 * tb * F * 2              # double-buffered bf16 input tiles
    out_tiles = 2 * tb * Cp * 4           # double-buffered f32 output tiles
    weights = F * H * 2 + H * Cp * 2 + 8 * H * 4 + 8 * Cp * 4   # single-buffered
    temps = tb * (4 * F * 4 + 3 * H * 4 + 2 * Cp * 4)           # in-body temporaries
    return x_tiles + out_tiles + weights + temps


def multitask_head(x, params, *, block_b=128):
    """Eval-mode forward of MultiTaskHead.  x: [B, F] f32; returns [B, C] f32."""
    B, F = x.shape
    H = params["w1"].shape[1]
    C = params["w2"].shape[1]

    # Lane-dense classifier output; full-width N on the 256-wide v6e/v7x MXU.
    Cp = _round_up(C, 256)

    # Batch tile: multiple of 16 sublanes (bf16 packing), shrunk to the VMEM
    # budget, balanced so padding stays small, and >=2 grid steps so v7x's
    # second TensorCore is not idle (harmless on single-TC v5e/v6e).
    block_b = max(16, (block_b // 16) * 16)
    while block_b > 16 and _vmem_bytes(block_b, F, H, Cp) > VMEM_BUDGET:
        block_b = max(16, _round_up(block_b // 2, 16))
    num_tiles = pl.cdiv(B, block_b)
    if B >= 16:
        num_tiles = max(num_tiles, 2)
    tb = _round_up(pl.cdiv(B, num_tiles), 16)
    Bp = num_tiles * tb

    # Stream x in bf16 (halves HBM traffic on the dominant stream).
    x_p = x.astype(jnp.bfloat16)
    if Bp != B:
        x_p = jnp.pad(x_p, ((0, Bp - B), (0, 0)))

    # Eval-mode fold of the LayerNorm affine into the first Linear:
    #   (xn*gamma + beta) @ w1 + b1 == xn @ (gamma[:,None]*w1) + (b1 + beta@w1)
    gamma = params["ln_gamma"].astype(jnp.float32)
    beta = params["ln_beta"].astype(jnp.float32)
    w1_f32 = params["w1"].astype(jnp.float32)
    w1 = (gamma[:, None] * w1_f32).astype(jnp.bfloat16)
    b1 = (params["b1"].astype(jnp.float32) + beta @ w1_f32).reshape(1, H)
    w2 = jnp.pad(params["w2"].astype(jnp.float32),
                 ((0, 0), (0, Cp - C))).astype(jnp.bfloat16)
    b2 = jnp.pad(params["b2"].astype(jnp.float32),
                 ((0, Cp - C),)).reshape(1, Cp)

    resident = lambda i: (0, 0)        # weights/biases: same block every step
    single = pl.Buffered(1)            # constant index map -> one buffer suffices

    flops = 2 * Bp * F * H + 2 * Bp * H * Cp
    transcendentals = Bp * H           # one tanh per hidden activation
    bytes_accessed = (Bp * F * 2 + F * H * 2 + H * Cp * 2
                      + (H + Cp) * 4 + Bp * Cp * 4)

    vmem_limit = int(min(max(_vmem_bytes(tb, F, H, Cp) * 5 // 4 + (2 << 20),
                             32 << 20), 56 << 20))

    out = pl.pallas_call(
        multitask_head_kernel,
        out_shape=jax.ShapeDtypeStruct((Bp, Cp), jnp.float32),
        grid=(num_tiles,),
        in_specs=[
            pl.BlockSpec((tb, F), lambda i: (i, 0)),                 # x: streamed
            pl.BlockSpec((F, H), resident, pipeline_mode=single),    # w1 (LN-folded)
            pl.BlockSpec((1, H), resident, pipeline_mode=single),    # b1 (LN-folded)
            pl.BlockSpec((H, Cp), resident, pipeline_mode=single),   # w2 (lane-padded)
            pl.BlockSpec((1, Cp), resident, pipeline_mode=single),   # b2 (lane-padded)
        ],
        out_specs=pl.BlockSpec((tb, Cp), lambda i: (i, 0)),
        compiler_params=pltpu.CompilerParams(
            dimension_semantics=("parallel",),
            vmem_limit_bytes=vmem_limit),
        cost_estimate=pl.CostEstimate(
            flops=flops,
            transcendentals=transcendentals,
            bytes_accessed=bytes_accessed),
    )(x_p, w1, b1, w2, b2)

    return out[:B, :C]


def init_params(key, in_features, hidden, num_classes):
    k1, k2, k3, k4 = jax.random.split(key, 4)
    return {
        # nn.LayerNorm defaults: weight=1, bias=0
        "ln_gamma": jnp.ones((in_features,), jnp.float32),
        "ln_beta": jnp.zeros((in_features,), jnp.float32),
        # Linear weights stored [in, out]
        "w1": 0.02 * jax.random.normal(k1, (in_features, hidden), jnp.float32),
        "b1": 0.01 * jax.random.normal(k2, (hidden,), jnp.float32),
        "w2": 0.02 * jax.random.normal(k3, (hidden, num_classes), jnp.float32),
        "b2": 0.01 * jax.random.normal(k4, (num_classes,), jnp.float32),
    }


def reference_mirror(x, p):
    """Pure-JAX reference mirroring the kernel's numerics: bf16 x stream,
    LN-affine fold, bf16 MXU inputs with f32 accumulation, tanh-GELU."""
    xb = x.astype(jnp.bfloat16).astype(jnp.float32)
    mean = jnp.mean(xb, axis=-1, keepdims=True)
    cent = xb - mean
    var = jnp.mean(cent * cent, axis=-1, keepdims=True)
    xn = cent * jax.lax.rsqrt(var + LN_EPS)
    w1f = p["ln_gamma"][:, None] * p["w1"]
    b1f = p["b1"] + p["ln_beta"] @ p["w1"]
    h = jnp.dot(xn.astype(jnp.bfloat16), w1f.astype(jnp.bfloat16),
                preferred_element_type=jnp.float32) + b1f
    h = 0.5 * h * (1.0 + jnp.tanh(SQRT_2_OVER_PI * (h + GELU_C * h * h * h)))
    return jnp.dot(h.astype(jnp.bfloat16), p["w2"].astype(jnp.bfloat16),
                   preferred_element_type=jnp.float32) + p["b2"]


def reference_exact(x, p):
    """Pure-f32 reference matching the PyTorch module (exact erf GELU)."""
    mean = jnp.mean(x, axis=-1, keepdims=True)
    var = jnp.mean((x - mean) ** 2, axis=-1, keepdims=True)
    xn = (x - mean) / jnp.sqrt(var + LN_EPS) * p["ln_gamma"] + p["ln_beta"]
    h = xn @ p["w1"] + p["b1"]
    h = 0.5 * h * (1.0 + jax.lax.erf(h * INV_SQRT2))
    return h @ p["w2"] + p["b2"]


if __name__ == "__main__":
    key = jax.random.PRNGKey(0)
    kx, kp = jax.random.split(key)

    # batch, in_features, hidden (fixed 512 by the module), num_classes
    B, F, H, C = 32, 256, 512, 10
    x = jax.random.normal(kx, (B, F), jnp.float32)
    params = init_params(kp, F, H, C)

    out = jax.block_until_ready(multitask_head(x, params))
    assert out.shape == (B, C)

    # Tight check against a reference mirroring the kernel's reduced-precision path.
    ref_m = reference_mirror(x, params)
    assert jnp.allclose(out, ref_m, atol=5e-3, rtol=5e-3), "mismatch vs mirrored reference"

    # Loose check against the exact f32 PyTorch-equivalent module (bf16 + tanh-GELU
    # introduce ~1e-3-level deviation, acceptable for inference).
    ref_e = reference_exact(x, params)
    assert jnp.allclose(out, ref_e, atol=2e-2, rtol=2e-2), "mismatch vs exact f32 reference"

    print("KERNEL_OK")
</pallas_src>

<mosaic_0001>
module attributes {stable_mosaic.version = 11 : i64} {
  func.func @multitask_head_kernel(%arg0: i32, %arg1: memref<16x256xbf16, #tpu.memory_space<vmem>>, %arg2: memref<256x512xbf16, #tpu.memory_space<vmem>>, %arg3: memref<1x512xf32, #tpu.memory_space<vmem>>, %arg4: memref<512x256xbf16, #tpu.memory_space<vmem>>, %arg5: memref<1x256xf32, #tpu.memory_space<vmem>>, %arg6: memref<16x256xf32, #tpu.memory_space<vmem>>) attributes {dimension_semantics = [#tpu.dimension_semantics<parallel>], iteration_bounds = array<i64: 2>, scalar_prefetch = 0 : i64, scratch_operands = 0 : i64, tpu.core_type = #tpu.core_type<tc>, window_params = [{transform_indices = @transform_0, window_bounds = array<i64: 16, 256>}, {pipeline_mode = #tpu.pipeline_mode<synchronous>, transform_indices = @transform_1, window_bounds = array<i64: 256, 512>}, {pipeline_mode = #tpu.pipeline_mode<synchronous>, transform_indices = @transform_2, window_bounds = array<i64: 1, 512>}, {pipeline_mode = #tpu.pipeline_mode<synchronous>, transform_indices = @transform_3, window_bounds = array<i64: 512, 256>}, {pipeline_mode = #tpu.pipeline_mode<synchronous>, transform_indices = @transform_4, window_bounds = array<i64: 1, 256>}, {transform_indices = @transform_5, window_bounds = array<i64: 16, 256>}]} {
    %c0 = arith.constant 0 : index
    %c0_0 = arith.constant 0 : index
    %0 = vector.load %arg1[%c0, %c0_0] : memref<16x256xbf16, #tpu.memory_space<vmem>>, vector<16x256xbf16>
    %1 = arith.extf %0 : vector<16x256xbf16> to vector<16x256xf32>
    %cst = arith.constant dense<0.000000e+00> : vector<16xf32>
    %2 = vector.multi_reduction <add>, %1, %cst [1] : vector<16x256xf32> to vector<16xf32>
    %3 = vector.shape_cast %2 : vector<16xf32> to vector<16x1xf32>
    %cst_1 = arith.constant 2.560000e+02 : f32
    %4 = vector.broadcast %cst_1 : f32 to vector<16x1xf32>
    %5 = arith.divf %3, %4 : vector<16x1xf32>
    %6 = vector.broadcast %5 : vector<16x1xf32> to vector<16x256xf32>
    %7 = arith.subf %1, %6 : vector<16x256xf32>
    %8 = arith.mulf %7, %7 : vector<16x256xf32>
    %cst_2 = arith.constant dense<0.000000e+00> : vector<16xf32>
    %9 = vector.multi_reduction <add>, %8, %cst_2 [1] : vector<16x256xf32> to vector<16xf32>
    %10 = vector.shape_cast %9 : vector<16xf32> to vector<16x1xf32>
    %cst_3 = arith.constant 2.560000e+02 : f32
    %11 = vector.broadcast %cst_3 : f32 to vector<16x1xf32>
    %12 = arith.divf %10, %11 : vector<16x1xf32>
    %cst_4 = arith.constant 9.99999974E-6 : f32
    %13 = vector.broadcast %cst_4 : f32 to vector<16x1xf32>
    %14 = arith.addf %12, %13 : vector<16x1xf32>
    %15 = math.rsqrt %14 : vector<16x1xf32>
    %16 = vector.broadcast %15 : vector<16x1xf32> to vector<16x256xf32>
    %17 = arith.mulf %7, %16 : vector<16x256xf32>
    %18 = arith.truncf %17 : vector<16x256xf32> to vector<16x256xbf16>
    %c0_5 = arith.constant 0 : index
    %c0_6 = arith.constant 0 : index
    %19 = vector.load %arg2[%c0_5, %c0_6] : memref<256x512xbf16, #tpu.memory_space<vmem>>, vector<256x512xbf16>
    %cst_7 = arith.constant dense<0.000000e+00> : vector<16x512xf32>
    %20 = tpu.matmul %18, %19, %cst_7 {dimension_numbers = #tpu.dot_dimension_numbers<[1], [0], [0], [1], [0, 0, 1, 1], [], []>} : vector<16x256xbf16>, vector<256x512xbf16>, vector<16x512xf32> -> vector<16x512xf32>
    %c0_8 = arith.constant 0 : index
    %c0_9 = arith.constant 0 : index
    %21 = vector.load %arg3[%c0_8, %c0_9] : memref<1x512xf32, #tpu.memory_space<vmem>>, vector<1x512xf32>
    %22 = vector.broadcast %21 : vector<1x512xf32> to vector<16x512xf32>
    %23 = arith.addf %20, %22 : vector<16x512xf32>
    %cst_10 = arith.constant 5.000000e-01 : f32
    %24 = vector.broadcast %cst_10 : f32 to vector<16x512xf32>
    %25 = arith.mulf %24, %23 : vector<16x512xf32>
    %cst_11 = arith.constant 4.471500e-02 : f32
    %26 = vector.broadcast %cst_11 : f32 to vector<16x512xf32>
    %27 = arith.mulf %26, %23 : vector<16x512xf32>
    %28 = arith.mulf %27, %23 : vector<16x512xf32>
    %29 = arith.mulf %28, %23 : vector<16x512xf32>
    %30 = arith.addf %23, %29 : vector<16x512xf32>
    %cst_12 = arith.constant 0.797884583 : f32
    %31 = vector.broadcast %cst_12 : f32 to vector<16x512xf32>
    %32 = arith.mulf %31, %30 : vector<16x512xf32>
    %33 = math.tanh %32 : vector<16x512xf32>
    %cst_13 = arith.constant 1.000000e+00 : f32
    %34 = vector.broadcast %cst_13 : f32 to vector<16x512xf32>
    %35 = arith.addf %34, %33 : vector<16x512xf32>
    %36 = arith.mulf %25, %35 : vector<16x512xf32>
    %37 = arith.truncf %36 : vector<16x512xf32> to vector<16x512xbf16>
    %c0_14 = arith.constant 0 : index
    %c0_15 = arith.constant 0 : index
    %38 = vector.load %arg4[%c0_14, %c0_15] : memref<512x256xbf16, #tpu.memory_space<vmem>>, vector<512x256xbf16>
    %cst_16 = arith.constant dense<0.000000e+00> : vector<16x256xf32>
    %39 = tpu.matmul %37, %38, %cst_16 {dimension_numbers = #tpu.dot_dimension_numbers<[1], [0], [0], [1], [0, 0, 1, 1], [], []>} : vector<16x512xbf16>, vector<512x256xbf16>, vector<16x256xf32> -> vector<16x256xf32>
    %c0_17 = arith.constant 0 : index
    %c0_18 = arith.constant 0 : index
    %40 = vector.load %arg5[%c0_17, %c0_18] : memref<1x256xf32, #tpu.memory_space<vmem>>, vector<1x256xf32>
    %41 = vector.broadcast %40 : vector<1x256xf32> to vector<16x256xf32>
    %42 = arith.addf %39, %41 : vector<16x256xf32>
    %c0_19 = arith.constant 0 : index
    %c0_20 = arith.constant 0 : index
    %43 = vector.load %arg6[%c0_19, %c0_20] : memref<16x256xf32, #tpu.memory_space<vmem>>, vector<16x256xf32>
    tpu.vector_store %arg6[%c0_19, %c0_20], %42 {strides = array<i32>} : memref<16x256xf32, #tpu.memory_space<vmem>>, vector<16x256xf32>,
    return
  }
  func.func @transform_0(%arg0: i32) -> (i32, i32) {
    %c0_i32 = arith.constant 0 : i32
    %c0_i32_0 = arith.constant 0 : i32
    return %arg0, %c0_i32 : i32, i32
  }
  func.func @transform_1(%arg0: i32) -> (i32, i32) {
    %c0_i32 = arith.constant 0 : i32
    %c0_i32_0 = arith.constant 0 : i32
    %c0_i32_1 = arith.constant 0 : i32
    return %c0_i32, %c0_i32_0 : i32, i32
  }
  func.func @transform_2(%arg0: i32) -> (i32, i32) {
    %c0_i32 = arith.constant 0 : i32
    %c0_i32_0 = arith.constant 0 : i32
    %c0_i32_1 = arith.constant 0 : i32
    return %c0_i32, %c0_i32_0 : i32, i32
  }
  func.func @transform_3(%arg0: i32) -> (i32, i32) {
    %c0_i32 = arith.constant 0 : i32
    %c0_i32_0 = arith.constant 0 : i32
    %c0_i32_1 = arith.constant 0 : i32
    return %c0_i32, %c0_i32_0 : i32, i32
  }
  func.func @transform_4(%arg0: i32) -> (i32, i32) {
    %c0_i32 = arith.constant 0 : i32
    %c0_i32_0 = arith.constant 0 : i32
    %c0_i32_1 = arith.constant 0 : i32
    return %c0_i32, %c0_i32_0 : i32, i32
  }
  func.func @transform_5(%arg0: i32) -> (i32, i32) {
    %c0_i32 = arith.constant 0 : i32
    %c0_i32_0 = arith.constant 0 : i32
    return %arg0, %c0_i32 : i32, i32
  }
}

</mosaic_0001>

<llo_original>
// kernel: tpu_custom_call.1
$region0: #{tpu_custom_call.1}
  #allocation0 [shape = 'u32[]', space=smem, size = 0x4, offset = 0x4, fixed_abs, tag = 'smem constant byte address 0x4 - core index']
  #allocation1 [shape = 'u32[72,128]{1,0:T(1,128)}', space=vmem, size = 0x9000, scoped, tag = 'internal scratch']
  %s0 = inlined_call_operand.hbm [shape: bf16[32,256], index: 0, kind: input, shape index: {}]
  %s1 = inlined_call_operand.hbm [shape: bf16[256,512], index: 1, kind: input, shape index: {}]
  %s2 = inlined_call_operand.hbm [shape: f32[1,512], index: 2, kind: input, shape index: {}]
  %s3 = inlined_call_operand.hbm [shape: bf16[512,256], index: 3, kind: input, shape index: {}]
  %s4 = inlined_call_operand.vmem [shape: f32[1,256], index: 4, kind: input, shape index: {}]
  %s5 = inlined_call_operand.hbm [shape: f32[32,256], index: 5, kind: output, shape index: {}]
  %s6 = sld [smem:[#allocation0]]
  $region69: #{tpu_custom_call.1} parent=0
    _
  %s8 = ssub.s32 1, %s6
  %s9 = scalar_select 0, %s8, %s6
  $region1: #{tpu_custom_call.1} parent=0
    #allocation2 [shape = 'u8[16384]{0}', space=vmem, size = 0x4000, scoped, tag = 'input window, operand 0']
    #allocation3 [shape = 's32[2]{0}', space=sflag, size = 0x8, scoped, tag = 'scoped memory for tpu_custom_call.1']
    #allocation4 [shape = 's32[2]{0}', space=sflag, size = 0x8, scoped, tag = 'scoped memory for tpu_custom_call.1']
    #allocation5 [shape = 'u8[262144]{0}', space=vmem, size = 0x40000, scoped, tag = 'input window, operand 1, single buffered']
    #allocation6 [shape = 's32[1]{0}', space=sflag, size = 0x4, scoped, tag = 'scoped memory for tpu_custom_call.1']
    #allocation7 [shape = 'u8[2048]{0}', space=vmem, size = 0x800, scoped, tag = 'input window, operand 2, single buffered']
    #allocation8 [shape = 'u8[262144]{0}', space=vmem, size = 0x40000, scoped, tag = 'input window, operand 3, single buffered']
    #allocation9 [shape = 's32[1]{0}', space=sflag, size = 0x4, scoped, tag = 'scoped memory for tpu_custom_call.1']
    #allocation10 [shape = 'u8[32768]{0}', space=vmem, size = 0x8000, scoped, tag = 'output window, operand 0']
    %10 = vsyncpa [#allocation3], 0
    %s11 = scalar_lea.sflag [#allocation3], 1
    %12 = vsyncpa %s11, 0
    %13 = vsyncpa [#allocation6], 0
    %14 = vsyncpa [#allocation9], 0
    %15 = vsyncpa [#allocation4], 0
    %s16 = scalar_lea.sflag [#allocation4], 1
    %17 = vsyncpa %s16, 0
    loop: start=0, step=1, limit=4
    $region2: #{tpu_custom_call.1} parent=1 // loop_pre_header
      _
    $region3: #{tpu_custom_call.1} parent=1 // loop_header
      %s19 = sphi 0, %s23
      %p20 = scmp.ge.s32.totalorder %s19, 4
      %s29 = sphi 0, %s31
      %s32 = sphi 0, %s29
      %s33 = sphi 0, %s32
      %s49 = sphi 0, %s33
      %s53 = sphi 0, %s53
      %s55 = sphi 0, %s53
      %s56 = sphi 0, %s55
      %s70 = sphi 0, %s56
      %s74 = sphi 0, %s74
      %s76 = sphi 0, %s74
      %s77 = sphi 0, %s76
      %s91 = sphi 0, %s77
      %s95 = sphi 0, %s95
      %s97 = sphi 0, %s95
      %s98 = sphi 0, %s97
      %s112 = sphi 0, %s98
      %s116 = sphi 0, %s116
      %s118 = sphi 0, %s116
      %s119 = sphi 0, %s118
      %s133 = sphi 0, %s119
      %s139 = sphi 0, %s141
      %s142 = sphi 0, %s139
      %s143 = sphi 0, %s142
      %s159 = sphi 0, %s143
    $region4: #{tpu_custom_call.1} parent=1 // loop_header_branch
      %22 = sbr.rel (%p20) target = $region8
    $region5: #{tpu_custom_call.1} parent=1 // loop_body
      %s24 = ssub.s32 %s19, 1
      %s25 = ssub.s32 %s19, 2
      %s26 = sadd.s32 %s19, 1
      %s27 = ssub.s32 %s19, %s26
      %p28 = scmp.eq.s32.totalorder %s27, 0
      %s30 = sadd.s32 %s29, 1
      %s31 = scalar_select %p28, %s29, %s30
      %p34 = pneg %p28
      %p35 = scmp.eq.s32.totalorder %s19, 1
      %p36 = por %p34, %p35
      %p37 = scmp.ne.s32.totalorder %s29, %s32
      %p38 = scmp.eq.s32.totalorder %s19, 0
      %p39 = por %p37, %p38
      %p40 = scmp.ne.s32.totalorder %s29, %s32
      %p41 = scmp.eq.s32.totalorder %s24, 1
      %p42 = por %p40, %p41
      %p43 = scmp.ne.s32.totalorder %s32, %s33
      %p44 = scmp.eq.s32.totalorder %s24, 0
      %p45 = por %p43, %p44
      %p46 = scmp.ne.s32.totalorder %s32, %s33
      %p47 = scmp.eq.s32.totalorder %s25, 1
      %p48 = por %p46, %p47
      %p50 = scmp.ne.s32.totalorder %s33, %s49
      %p51 = scmp.eq.s32.totalorder %s25, 0
      %p52 = por %p50, %p51
      %s54 = sadd.s32 %s53, 1
      %p57 = scmp.eq.s32.totalorder %s19, 1
      %p58 = scmp.ne.s32.totalorder %s53, %s55
      %p59 = scmp.eq.s32.totalorder %s19, 0
      %p60 = por %p58, %p59
      %p61 = scmp.ne.s32.totalorder %s53, %s55
      %p62 = scmp.eq.s32.totalorder %s24, 1
      %p63 = por %p61, %p62
      %p64 = scmp.ne.s32.totalorder %s55, %s56
      %p65 = scmp.eq.s32.totalorder %s24, 0
      %p66 = por %p64, %p65
      %p67 = scmp.ne.s32.totalorder %s55, %s56
      %p68 = scmp.eq.s32.totalorder %s25, 1
      %p69 = por %p67, %p68
      %p71 = scmp.ne.s32.totalorder %s56, %s70
      %p72 = scmp.eq.s32.totalorder %s25, 0
      %p73 = por %p71, %p72
      %s75 = sadd.s32 %s74, 1
      %p78 = scmp.eq.s32.totalorder %s19, 1
      %p79 = scmp.ne.s32.totalorder %s74, %s76
      %p80 = scmp.eq.s32.totalorder %s19, 0
      %p81 = por %p79, %p80
      %p82 = scmp.ne.s32.totalorder %s74, %s76
      %p83 = scmp.eq.s32.totalorder %s24, 1
      %p84 = por %p82, %p83
      %p85 = scmp.ne.s32.totalorder %s76, %s77
      %p86 = scmp.eq.s32.totalorder %s24, 0
      %p87 = por %p85, %p86
      %p88 = scmp.ne.s32.totalorder %s76, %s77
      %p89 = scmp.eq.s32.totalorder %s25, 1
      %p90 = por %p88, %p89
      %p92 = scmp.ne.s32.totalorder %s77, %s91
      %p93 = scmp.eq.s32.totalorder %s25, 0
      %p94 = por %p92, %p93
      %s96 = sadd.s32 %s95, 1
      %p99 = scmp.eq.s32.totalorder %s19, 1
      %p100 = scmp.ne.s32.totalorder %s95, %s97
      %p101 = scmp.eq.s32.totalorder %s19, 0
      %p102 = por %p100, %p101
      %p103 = scmp.ne.s32.totalorder %s95, %s97
      %p104 = scmp.eq.s32.totalorder %s24, 1
      %p105 = por %p103, %p104
      %p106 = scmp.ne.s32.totalorder %s97, %s98
      %p107 = scmp.eq.s32.totalorder %s24, 0
      %p108 = por %p106, %p107
      %p109 = scmp.ne.s32.totalorder %s97, %s98
      %p110 = scmp.eq.s32.totalorder %s25, 1
      %p111 = por %p109, %p110
      %p113 = scmp.ne.s32.totalorder %s98, %s112
      %p114 = scmp.eq.s32.totalorder %s25, 0
      %p115 = por %p113, %p114
      %s117 = sadd.s32 %s116, 1
      %p120 = scmp.eq.s32.totalorder %s19, 1
      %p121 = scmp.ne.s32.totalorder %s116, %s118
      %p122 = scmp.eq.s32.totalorder %s19, 0
      %p123 = por %p121, %p122
      %p124 = scmp.ne.s32.totalorder %s116, %s118
      %p125 = scmp.eq.s32.totalorder %s24, 1
      %p126 = por %p124, %p125
      %p127 = scmp.ne.s32.totalorder %s118, %s119
      %p128 = scmp.eq.s32.totalorder %s24, 0
      %p129 = por %p127, %p128
      %p130 = scmp.ne.s32.totalorder %s118, %s119
      %p131 = scmp.eq.s32.totalorder %s25, 1
      %p132 = por %p130, %p131
      %p134 = scmp.ne.s32.totalorder %s119, %s133
      %p135 = scmp.eq.s32.totalorder %s25, 0
      %p136 = por %p134, %p135
      %s137 = ssub.s32 %s19, %s26
      %p138 = scmp.eq.s32.totalorder %s137, 0
      %s140 = sadd.s32 %s139, 1
      %s141 = scalar_select %p138, %s139, %s140
      %p144 = pneg %p138
      %p145 = scmp.eq.s32.totalorder %s19, 1
      %p146 = por %p144, %p145
      %p147 = scmp.ne.s32.totalorder %s139, %s142
      %p148 = scmp.eq.s32.totalorder %s19, 0
      %p149 = por %p147, %p148
      %p150 = scmp.ne.s32.totalorder %s139, %s142
      %p151 = scmp.eq.s32.totalorder %s24, 1
      %p152 = por %p150, %p151
      %p153 = scmp.ne.s32.totalorder %s142, %s143
      %p154 = scmp.eq.s32.totalorder %s24, 0
      %p155 = por %p153, %p154
      %p156 = scmp.ne.s32.totalorder %s142, %s143
      %p157 = scmp.eq.s32.totalorder %s25, 1
      %p158 = por %p156, %p157
      %p160 = scmp.ne.s32.totalorder %s143, %s159
      %p161 = scmp.eq.s32.totalorder %s25, 0
      %p162 = por %p160, %p161
      %p163 = scmp.le.s32.totalorder 1, %s19
      %p164 = scmp.lt.s32.totalorder %s19, 3
      %p165 = pnand %p163, %p164
      %p166 = pneg %p165
      // Predicated region
      $region9: #{tpu_custom_call.1} parent=5 // pred_check
        _
      $region10: #{tpu_custom_call.1} parent=5 // pred_check_branch
        %168 = sbr.rel (%p165) target = $region12
      $region11: #{tpu_custom_call.1} parent=5 // pred_region
        %s169 = ssub.s32 %s19, 1
        // Predicated region
        $region13: #{tpu_custom_call.1} parent=11 // pred_check
          %p170 = pneg %p66
        $region14: #{tpu_custom_call.1} parent=11 // pred_check_branch
          %172 = sbr.rel (%p170) target = $region16
        $region15: #{tpu_custom_call.1} parent=11 // pred_region
          %174 = vsyncadd [#allocation6], 0
          %s175 = sshll.u32 %s1, 4
          %s176 = int_to_ptr.hbm [resolvable:$true] %s175
          %s177 = sshll.u32 [#allocation5], 4
          %s178 = int_to_ptr.vmem [resolvable:$true] %s177
          %183 = dma.hbm_to_vmem [thread:$0]  %s176, 8192, %s178, [#allocation6], 256, 256, 16
        $region16: #{tpu_custom_call.1} parent=11 // pred_fallthru
          _
        // Predicated region
        $region17: #{tpu_custom_call.1} parent=11 // pred_check
          %p184 = pneg %p87
        $region18: #{tpu_custom_call.1} parent=11 // pred_check_branch
          %186 = sbr.rel (%p184) target = $region20
        $region19: #{tpu_custom_call.1} parent=11 // pred_region
          %188 = vsyncadd [#allocation6], 0
          %s190 = sshll.u32 %s2, 4
          %s191 = int_to_ptr.hbm [resolvable:$true] %s190
          %s192 = sshll.u32 [#allocation7], 4
          %s193 = int_to_ptr.vmem [resolvable:$true] %s192
          %195 = dma.hbm_to_vmem [thread:$0]  %s191, 64, %s193, [#allocation6]
        $region20: #{tpu_custom_call.1} parent=11 // pred_fallthru
          _
        // Predicated region
        $region21: #{tpu_custom_call.1} parent=11 // pred_check
          %p196 = pneg %p108
        $region22: #{tpu_custom_call.1} parent=11 // pred_check_branch
          %198 = sbr.rel (%p196) target = $region24
        $region23: #{tpu_custom_call.1} parent=11 // pred_region
          %200 = vsyncadd [#allocation9], 0
          %s201 = sshll.u32 %s3, 4
          %s202 = int_to_ptr.hbm [resolvable:$true] %s201
          %s203 = sshll.u32 [#allocation8], 4
          %s204 = int_to_ptr.vmem [resolvable:$true] %s203
          %209 = dma.hbm_to_vmem [thread:$0]  %s202, 8192, %s204, [#allocation9], 128, 128, 8
        $region24: #{tpu_custom_call.1} parent=11 // pred_fallthru
          _
        // Predicated region
        $region25: #{tpu_custom_call.1} parent=11 // pred_check
          %p210 = pneg %p129
        $region26: #{tpu_custom_call.1} parent=11 // pred_check_branch
          %212 = sbr.rel (%p210) target = $region28
        $region27: #{tpu_custom_call.1} parent=11 // pred_region
          _
        $region28: #{tpu_custom_call.1} parent=11 // pred_fallthru
          _
      $region12: #{tpu_custom_call.1} parent=5 // pred_fallthru
        _
      %p213 = scmp.lt.s32.totalorder %s19, 2
      // Predicated region
      $region29: #{tpu_custom_call.1} parent=5 // pred_check
        %p214 = pneg %p213
      $region30: #{tpu_custom_call.1} parent=5 // pred_check_branch
        %216 = sbr.rel (%p214) target = $region32
      $region31: #{tpu_custom_call.1} parent=5 // pred_region
        // Predicated region
        $region33: #{tpu_custom_call.1} parent=31 // pred_check
          %p217 = pneg %p39
        $region34: #{tpu_custom_call.1} parent=31 // pred_check_branch
          %219 = sbr.rel (%p217) target = $region36
        $region35: #{tpu_custom_call.1} parent=31 // pred_region
          %s220 = sand.u32 %s29, 1
          %s221 = scalar_lea.sflag [#allocation3], %s220
          %s222 = sand.u32 %s29, 1
          %s223 = smul.addr %s222, 16
          %s224 = scalar_lea.vmem [#allocation2], %s223
          %s225 = smul.u32 2, %s19
          %227 = vsyncadd %s221, 0
          %s228 = smul.addr %s225, 2
          %s229 = smul.addr %s228, 4
          %s230 = scalar_lea.hbm %s0, %s229
          %s231 = sshll.u32 %s230, 4
          %s232 = int_to_ptr.hbm [resolvable:$true] %s231
          %s233 = sshll.u32 %s224, 4
          %s234 = int_to_ptr.vmem [resolvable:$true] %s233
          %239 = dma.hbm_to_vmem [thread:$0]  %s232, 256, %s234, %s221, 128, 128, 8
        $region36: #{tpu_custom_call.1} parent=31 // pred_fallthru
          _
      $region32: #{tpu_custom_call.1} parent=5 // pred_fallthru
        _
      %p240 = scmp.le.s32.totalorder 1, %s19
      %p241 = scmp.lt.s32.totalorder %s19, 3
      %p242 = pnand %p240, %p241
      %p243 = pneg %p242
      // Predicated region
      $region37: #{tpu_custom_call.1} parent=5 // pred_check
        _
      $region38: #{tpu_custom_call.1} parent=5 // pred_check_branch
        %245 = sbr.rel (%p242) target = $region40
      $region39: #{tpu_custom_call.1} parent=5 // pred_region
        %s246 = ssub.s32 %s19, 1
        %s247 = sand.u32 %s32, 1
        %s248 = scalar_lea.sflag [#allocation3], %s247
        %s249 = sand.u32 %s32, 1
        %s250 = smul.addr %s249, 16
        %s251 = scalar_lea.vmem [#allocation2], %s250
        // Predicated region
        $region41: #{tpu_custom_call.1} parent=39 // pred_check
          %p252 = pneg %p45
        $region42: #{tpu_custom_call.1} parent=39 // pred_check_branch
          %254 = sbr.rel (%p252) target = $region44
        $region43: #{tpu_custom_call.1} parent=39 // pred_region
          %256 = dma.done %s248, 256
        $region44: #{tpu_custom_call.1} parent=39 // pred_fallthru
          _
        // Predicated region
        $region45: #{tpu_custom_call.1} parent=39 // pred_check
          %p257 = pneg %p66
        $region46: #{tpu_custom_call.1} parent=39 // pred_check_branch
          %259 = sbr.rel (%p257) target = $region48
        $region47: #{tpu_custom_call.1} parent=39 // pred_region
          %261 = dma.done [#allocation6], 8192
        $region48: #{tpu_custom_call.1} parent=39 // pred_fallthru
          _
        // Predicated region
        $region49: #{tpu_custom_call.1} parent=39 // pred_check
          %p262 = pneg %p87
        $region50: #{tpu_custom_call.1} parent=39 // pred_check_branch
          %264 = sbr.rel (%p262) target = $region52
        $region51: #{tpu_custom_call.1} parent=39 // pred_region
          %266 = dma.done [#allocation6], 64
        $region52: #{tpu_custom_call.1} parent=39 // pred_fallthru
          _
        // Predicated region
        $region53: #{tpu_custom_call.1} parent=39 // pred_check
          %p267 = pneg %p108
        $region54: #{tpu_custom_call.1} parent=39 // pred_check_branch
          %269 = sbr.rel (%p267) target = $region56
        $region55: #{tpu_custom_call.1} parent=39 // pred_region
          %271 = dma.done [#allocation9], 8192
        $region56: #{tpu_custom_call.1} parent=39 // pred_fallthru
          _
        %s272 = sand.u32 %s32, 1
        %s273 = scalar_lea.sflag [#allocation3], %s272
        %s274 = sand.u32 %s32, 1
        %s275 = smul.addr %s274, 16
        %s276 = scalar_lea.vmem [#allocation2], %s275
        %p277 = pneg %p45
        %p278 = pneg %p42
        %p279 = pneg %p66
        %p280 = pneg %p63
        %p281 = pneg %p87
        %p282 = pneg %p84
        %p283 = pneg %p108
        %p284 = pneg %p105
        %p285 = pneg %p129
        %p286 = pneg %p126
        %p287 = pneg %p155
        %p288 = pneg %p152
        %s289 = sand.u32 %s142, 1
        %s290 = scalar_lea.sflag [#allocation4], %s289
        %s291 = sand.u32 %s142, 1
        %s292 = smul.addr %s291, 32
        %s293 = scalar_lea.vmem [#allocation10], %s292
        %s294 = smul.u32 2, %s24
        %s295 = smul.u32 2, %s24
        %v296 = vld [vmem:[%s251] sm:$0xff]
        %v297 = vld [vmem:[%s251 + $0x8] sm:$0xff]
        %v298 = vunpack.c.l.bf16 %v296
        %v299 = vunpack.c.h.bf16 %v296
        %v300 = vunpack.c.l.bf16 %v297
        %v301 = vunpack.c.h.bf16 %v297
        %v302 = vadd.f32 %v298, %v299
        %303 = vadd.xlane.f32.xlu0 %v302
        %v304 = vpop.xlane.xlu0 %303
        %v305 = vadd.f32 %v300, %v301
        %306 = vadd.xlane.f32.xlu0 %v305
        %v307 = vpop.xlane.xlu0 %306
        %v308 = vrcp.pop 256.0
        %v309 = vmul.f32 256.0, %v308
        %v310 = vsub.f32 1.0, %v309
        %v311 = vmul.f32 %v308, %v310
        %v312 = vadd.f32 %v308, %v311
        %vm313 = vweird.f32 %v308
        %v314 = vsel %vm313, %v308, %v312
        %v315 = vmul.f32 %v304, %v314
        %v316 = vmul.f32 %v307, %v314
        %v317 = vsub.f32 %v298, %v315
        %v318 = vsub.f32 %v299, %v315
        %v319 = vsub.f32 %v300, %v316
        %v320 = vsub.f32 %v301, %v316
        %v321 = vmul.f32 %v317, %v317
        %v322 = vmul.f32 %v318, %v318
        %v323 = vmul.f32 %v319, %v319
        %v324 = vmul.f32 %v320, %v320
        %v325 = vadd.f32 %v321, %v322
        %326 = vadd.xlane.f32.xlu0 %v325
        %v327 = vpop.xlane.xlu0 %326
        %v328 = vadd.f32 %v323, %v324
        %329 = vadd.xlane.f32.xlu0 %v328
        %v330 = vpop.xlane.xlu0 %329
        %v331 = vmul.f32 %v327, %v314
        %v332 = vmul.f32 %v330, %v314
        %v333 = vadd.f32 %v331, 1e-05
        %v334 = vadd.f32 %v332, 1e-05
        %v335 = vrsqrt.pop %v333
        %v336 = vmul.f32 %v335, %v333
        %v337 = vmul.f32 %v336, %v335
        %v338 = vmul.f32 0.5, %v337
        %v339 = vsub.f32 1.5, %v338
        %v340 = vmul.f32 %v335, %v339
        %vm341 = vweird.f32 %v333
        %vm342 = vweird.f32 %v335
        %vm343 = vmor %vm341, %vm342
        %v344 = vsel %vm343, %v335, %v340
        %v345 = vrsqrt.pop %v334
        %v346 = vmul.f32 %v345, %v334
        %v347 = vmul.f32 %v346, %v345
        %v348 = vmul.f32 0.5, %v347
        %v349 = vsub.f32 1.5, %v348
        %v350 = vmul.f32 %v345, %v349
        %vm351 = vweird.f32 %v334
        %vm352 = vweird.f32 %v345
        %vm353 = vmor %vm351, %vm352
        %v354 = vsel %vm353, %v345, %v350
        %v355 = vmul.f32 %v317, %v344
        %v356 = vmul.f32 %v318, %v344
        %v357 = vmul.f32 %v319, %v354
        %v358 = vmul.f32 %v320, %v354
        %v359 = vpack.c.bf16 %v357, %v355
        %v360 = vpack.c.bf16 %v358, %v356
        %v361 = vld [vmem:[#allocation5] sm:$0xff]
        %v362 = vld [vmem:[#allocation5 + $0x8] sm:$0xff]
        %v363 = vld [vmem:[#allocation5 + $0x10] sm:$0xff]
        %v364 = vld [vmem:[#allocation5 + $0x18] sm:$0xff]
        %v365 = vld [vmem:[#allocation5 + $0x20] sm:$0xff]
        %v366 = vld [vmem:[#allocation5 + $0x28] sm:$0xff]
        %v367 = vld [vmem:[#allocation5 + $0x30] sm:$0xff]
        %v368 = vld [vmem:[#allocation5 + $0x38] sm:$0xff]
        %v369 = vld [vmem:[#allocation5 + $0x40] sm:$0xff]
        %v370 = vld [vmem:[#allocation5 + $0x48] sm:$0xff]
        %v371 = vld [vmem:[#allocation5 + $0x50] sm:$0xff]
        %v372 = vld [vmem:[#allocation5 + $0x58] sm:$0xff]
        %v373 = vld [vmem:[#allocation5 + $0x60] sm:$0xff]
        %v374 = vld [vmem:[#allocation5 + $0x68] sm:$0xff]
        %v375 = vld [vmem:[#allocation5 + $0x70] sm:$0xff]
        %v376 = vld [vmem:[#allocation5 + $0x78] sm:$0xff]
        %v377 = vld [vmem:[#allocation5 + $0x80] sm:$0xff]
        %v378 = vld [vmem:[#allocation5 + $0x88] sm:$0xff]
        %v379 = vld [vmem:[#allocation5 + $0x90] sm:$0xff]
        %v380 = vld [vmem:[#allocation5 + $0x98] sm:$0xff]
        %v381 = vld [vmem:[#allocation5 + $0xa0] sm:$0xff]
        %v382 = vld [vmem:[#allocation5 + $0xa8] sm:$0xff]
        %v383 = vld [vmem:[#allocation5 + $0xb0] sm:$0xff]
        %v384 = vld [vmem:[#allocation5 + $0xb8] sm:$0xff]
        %v385 = vld [vmem:[#allocation5 + $0xc0] sm:$0xff]
        %v386 = vld [vmem:[#allocation5 + $0xc8] sm:$0xff]
        %v387 = vld [vmem:[#allocation5 + $0xd0] sm:$0xff]
        %v388 = vld [vmem:[#allocation5 + $0xd8] sm:$0xff]
        %v389 = vld [vmem:[#allocation5 + $0xe0] sm:$0xff]
        %v390 = vld [vmem:[#allocation5 + $0xe8] sm:$0xff]
        %v391 = vld [vmem:[#allocation5 + $0xf0] sm:$0xff]
        %v392 = vld [vmem:[#allocation5 + $0xf8] sm:$0xff]
        %v393 = vld [vmem:[#allocation5 + $0x100] sm:$0xff]
        %v394 = vld [vmem:[#allocation5 + $0x108] sm:$0xff]
        %v395 = vld [vmem:[#allocation5 + $0x110] sm:$0xff]
        %v396 = vld [vmem:[#allocation5 + $0x118] sm:$0xff]
        %v397 = vld [vmem:[#allocation5 + $0x120] sm:$0xff]
        %v398 = vld [vmem:[#allocation5 + $0x128] sm:$0xff]
        %v399 = vld [vmem:[#allocation5 + $0x130] sm:$0xff]
        %v400 = vld [vmem:[#allocation5 + $0x138] sm:$0xff]
        %v401 = vld [vmem:[#allocation5 + $0x140] sm:$0xff]
        %v402 = vld [vmem:[#allocation5 + $0x148] sm:$0xff]
        %v403 = vld [vmem:[#allocation5 + $0x150] sm:$0xff]
        %v404 = vld [vmem:[#allocation5 + $0x158] sm:$0xff]
        %v405 = vld [vmem:[#allocation5 + $0x160] sm:$0xff]
        %v406 = vld [vmem:[#allocation5 + $0x168] sm:$0xff]
        %v407 = vld [vmem:[#allocation5 + $0x170] sm:$0xff]
        %v408 = vld [vmem:[#allocation5 + $0x178] sm:$0xff]
        %v409 = vld [vmem:[#allocation5 + $0x180] sm:$0xff]
        %v410 = vld [vmem:[#allocation5 + $0x188] sm:$0xff]
        %v411 = vld [vmem:[#allocation5 + $0x190] sm:$0xff]
        %v412 = vld [vmem:[#allocation5 + $0x198] sm:$0xff]
        %v413 = vld [vmem:[#allocation5 + $0x1a0] sm:$0xff]
        %v414 = vld [vmem:[#allocation5 + $0x1a8] sm:$0xff]
        %v415 = vld [vmem:[#allocation5 + $0x1b0] sm:$0xff]
        %v416 = vld [vmem:[#allocation5 + $0x1b8] sm:$0xff]
        %v417 = vld [vmem:[#allocation5 + $0x1c0] sm:$0xff]
        %v418 = vld [vmem:[#allocation5 + $0x1c8] sm:$0xff]
        %v419 = vld [vmem:[#allocation5 + $0x1d0] sm:$0xff]
        %v420 = vld [vmem:[#allocation5 + $0x1d8] sm:$0xff]
        %v421 = vld [vmem:[#allocation5 + $0x1e0] sm:$0xff]
        %v422 = vld [vmem:[#allocation5 + $0x1e8] sm:$0xff]
        %v423 = vld [vmem:[#allocation5 + $0x1f0] sm:$0xff]
        %v424 = vld [vmem:[#allocation5 + $0x1f8] sm:$0xff]
        %v425 = vld [vmem:[#allocation7] sm:$0xf]
        %v427 = vperm.slane %v425, 0
        %v428 = vperm.slane %v425, 1
        %v429 = vperm.slane %v425, 2
        %v430 = vperm.slane %v425, 3
        %v499 = vunpack.c.l.b16 %v361
        %v500 = vunpack.c.h.b16 %v361
        %v501 = vunpack.c.l.b16 %v362
        %v502 = vunpack.c.h.b16 %v362
        %v503 = vunpack.c.l.b16 %v363
        %v504 = vunpack.c.h.b16 %v363
        %v505 = vunpack.c.l.b16 %v364
        %v506 = vunpack.c.h.b16 %v364
        %v507 = vunpack.c.l.b16 %v365
        %v508 = vunpack.c.h.b16 %v365
        %v509 = vunpack.c.l.b16 %v366
        %v510 = vunpack.c.h.b16 %v366
        %v511 = vunpack.c.l.b16 %v367
        %v512 = vunpack.c.h.b16 %v367
        %v513 = vunpack.c.l.b16 %v368
        %v514 = vunpack.c.h.b16 %v368
        %v515 = vunpack.c.l.b16 %v369
        %v516 = vunpack.c.h.b16 %v369
        %v517 = vunpack.c.l.b16 %v370
        %v518 = vunpack.c.h.b16 %v370
        %v519 = vunpack.c.l.b16 %v371
        %v520 = vunpack.c.h.b16 %v371
        %v521 = vunpack.c.l.b16 %v372
        %v522 = vunpack.c.h.b16 %v372
        %v523 = vunpack.c.l.b16 %v373
        %v524 = vunpack.c.h.b16 %v373
        %v525 = vunpack.c.l.b16 %v374
        %v526 = vunpack.c.h.b16 %v374
        %v527 = vunpack.c.l.b16 %v375
        %v528 = vunpack.c.h.b16 %v375
        %v529 = vunpack.c.l.b16 %v376
        %v530 = vunpack.c.h.b16 %v376
        %v531 = vunpack.c.l.b16 %v377
        %v532 = vunpack.c.h.b16 %v377
        %v533 = vunpack.c.l.b16 %v378
        %v534 = vunpack.c.h.b16 %v378
        %v535 = vunpack.c.l.b16 %v379
        %v536 = vunpack.c.h.b16 %v379
        %v537 = vunpack.c.l.b16 %v380
        %v538 = vunpack.c.h.b16 %v380
        %v539 = vunpack.c.l.b16 %v381
        %v540 = vunpack.c.h.b16 %v381
        %v541 = vunpack.c.l.b16 %v382
        %v542 = vunpack.c.h.b16 %v382
        %v543 = vunpack.c.l.b16 %v383
        %v544 = vunpack.c.h.b16 %v383
        %v545 = vunpack.c.l.b16 %v384
        %v546 = vunpack.c.h.b16 %v384
        %v547 = vunpack.c.l.b16 %v385
        %v548 = vunpack.c.h.b16 %v385
        %v549 = vunpack.c.l.b16 %v386
        %v550 = vunpack.c.h.b16 %v386
        %v551 = vunpack.c.l.b16 %v387
        %v552 = vunpack.c.h.b16 %v387
        %v553 = vunpack.c.l.b16 %v388
        %v554 = vunpack.c.h.b16 %v388
        %v555 = vunpack.c.l.b16 %v389
        %v556 = vunpack.c.h.b16 %v389
        %v557 = vunpack.c.l.b16 %v390
        %v558 = vunpack.c.h.b16 %v390
        %v559 = vunpack.c.l.b16 %v391
        %v560 = vunpack.c.h.b16 %v391
        %v561 = vunpack.c.l.b16 %v392
        %v562 = vunpack.c.h.b16 %v392
        %v563 = vunpack.c.l.b16 %v393
        %v564 = vunpack.c.h.b16 %v393
        %v565 = vunpack.c.l.b16 %v394
        %v566 = vunpack.c.h.b16 %v394
        %v567 = vunpack.c.l.b16 %v395
        %v568 = vunpack.c.h.b16 %v395
        %v569 = vunpack.c.l.b16 %v396
        %v570 = vunpack.c.h.b16 %v396
        %v571 = vunpack.c.l.b16 %v397
        %v572 = vunpack.c.h.b16 %v397
        %v573 = vunpack.c.l.b16 %v398
        %v574 = vunpack.c.h.b16 %v398
        %v575 = vunpack.c.l.b16 %v399
        %v576 = vunpack.c.h.b16 %v399
        %v577 = vunpack.c.l.b16 %v400
        %v578 = vunpack.c.h.b16 %v400
        %v579 = vunpack.c.l.b16 %v401
        %v580 = vunpack.c.h.b16 %v401
        %v581 = vunpack.c.l.b16 %v402
        %v582 = vunpack.c.h.b16 %v402
        %v583 = vunpack.c.l.b16 %v403
        %v584 = vunpack.c.h.b16 %v403
        %v585 = vunpack.c.l.b16 %v404
        %v586 = vunpack.c.h.b16 %v404
        %v587 = vunpack.c.l.b16 %v405
        %v588 = vunpack.c.h.b16 %v405
        %v589 = vunpack.c.l.b16 %v406
        %v590 = vunpack.c.h.b16 %v406
        %v591 = vunpack.c.l.b16 %v407
        %v592 = vunpack.c.h.b16 %v407
        %v593 = vunpack.c.l.b16 %v408
        %v594 = vunpack.c.h.b16 %v408
        %v595 = vunpack.c.l.b16 %v409
        %v596 = vunpack.c.h.b16 %v409
        %v597 = vunpack.c.l.b16 %v410
        %v598 = vunpack.c.h.b16 %v410
        %v599 = vunpack.c.l.b16 %v411
        %v600 = vunpack.c.h.b16 %v411
        %v601 = vunpack.c.l.b16 %v412
        %v602 = vunpack.c.h.b16 %v412
        %v603 = vunpack.c.l.b16 %v413
        %v604 = vunpack.c.h.b16 %v413
        %v605 = vunpack.c.l.b16 %v414
        %v606 = vunpack.c.h.b16 %v414
        %v607 = vunpack.c.l.b16 %v415
        %v608 = vunpack.c.h.b16 %v415
        %v609 = vunpack.c.l.b16 %v416
        %v610 = vunpack.c.h.b16 %v416
        %v611 = vunpack.c.l.b16 %v417
        %v612 = vunpack.c.h.b16 %v417
        %v613 = vunpack.c.l.b16 %v418
        %v614 = vunpack.c.h.b16 %v418
        %v615 = vunpack.c.l.b16 %v419
        %v616 = vunpack.c.h.b16 %v419
        %v617 = vunpack.c.l.b16 %v420
        %v618 = vunpack.c.h.b16 %v420
        %v619 = vunpack.c.l.b16 %v421
        %v620 = vunpack.c.h.b16 %v421
        %v621 = vunpack.c.l.b16 %v422
        %v622 = vunpack.c.h.b16 %v422
        %v623 = vunpack.c.l.b16 %v423
        %v624 = vunpack.c.h.b16 %v423
        %v625 = vunpack.c.l.b16 %v424
        %v626 = vunpack.c.h.b16 %v424
        %v627 = vpack.c.b16 %v503, %v499
        %v628 = vpack.c.b16 %v504, %v500
        %v629 = vpack.c.b16 %v505, %v501
        %v630 = vpack.c.b16 %v506, %v502
        %v631 = vpack.c.b16 %v511, %v507
        %v632 = vpack.c.b16 %v512, %v508
        %v633 = vpack.c.b16 %v513, %v509
        %v634 = vpack.c.b16 %v514, %v510
        %v635 = vpack.c.b16 %v519, %v515
        %v636 = vpack.c.b16 %v520, %v516
        %v637 = vpack.c.b16 %v521, %v517
        %v638 = vpack.c.b16 %v522, %v518
        %v639 = vpack.c.b16 %v527, %v523
        %v640 = vpack.c.b16 %v528, %v524
        %v641 = vpack.c.b16 %v529, %v525
        %v642 = vpack.c.b16 %v530, %v526
        %v643 = vpack.c.b16 %v535, %v531
        %v644 = vpack.c.b16 %v536, %v532
        %v645 = vpack.c.b16 %v537, %v533
        %v646 = vpack.c.b16 %v538, %v534
        %v647 = vpack.c.b16 %v543, %v539
        %v648 = vpack.c.b16 %v544, %v540
        %v649 = vpack.c.b16 %v545, %v541
        %v650 = vpack.c.b16 %v546, %v542
        %v651 = vpack.c.b16 %v551, %v547
        %v652 = vpack.c.b16 %v552, %v548
        %v653 = vpack.c.b16 %v553, %v549
        %v654 = vpack.c.b16 %v554, %v550
        %v655 = vpack.c.b16 %v559, %v555
        %v656 = vpack.c.b16 %v560, %v556
        %v657 = vpack.c.b16 %v561, %v557
        %v658 = vpack.c.b16 %v562, %v558
        %v659 = vpack.c.b16 %v567, %v563
        %v660 = vpack.c.b16 %v568, %v564
        %v661 = vpack.c.b16 %v569, %v565
        %v662 = vpack.c.b16 %v570, %v566
        %v663 = vpack.c.b16 %v575, %v571
        %v664 = vpack.c.b16 %v576, %v572
        %v665 = vpack.c.b16 %v577, %v573
        %v666 = vpack.c.b16 %v578, %v574
        %v667 = vpack.c.b16 %v583, %v579
        %v668 = vpack.c.b16 %v584, %v580
        %v669 = vpack.c.b16 %v585, %v581
        %v670 = vpack.c.b16 %v586, %v582
        %v671 = vpack.c.b16 %v591, %v587
        %v672 = vpack.c.b16 %v592, %v588
        %v673 = vpack.c.b16 %v593, %v589
        %v674 = vpack.c.b16 %v594, %v590
        %v675 = vpack.c.b16 %v599, %v595
        %v676 = vpack.c.b16 %v600, %v596
        %v677 = vpack.c.b16 %v601, %v597
        %v678 = vpack.c.b16 %v602, %v598
        %v679 = vpack.c.b16 %v607, %v603
        %v680 = vpack.c.b16 %v608, %v604
        %v681 = vpack.c.b16 %v609, %v605
        %v682 = vpack.c.b16 %v610, %v606
        %v683 = vpack.c.b16 %v615, %v611
        %v684 = vpack.c.b16 %v616, %v612
        %v685 = vpack.c.b16 %v617, %v613
        %v686 = vpack.c.b16 %v618, %v614
        %v687 = vpack.c.b16 %v623, %v619
        %v688 = vpack.c.b16 %v624, %v620
        %v689 = vpack.c.b16 %v625, %v621
        %v690 = vpack.c.b16 %v626, %v622
        %755 = vmatpush.bf16.msra.mxu0 %v655
        %756 = vmatpush.bf16.msra.mxu0 %v651
        %757 = vmatpush.bf16.msra.mxu0 %v647
        %758 = vmatpush.bf16.msra.mxu0 %v643
        %759 = vmatpush.bf16.msra.mxu0 %v639
        %760 = vmatpush.bf16.msra.mxu0 %v635
        %761 = vmatpush.bf16.msra.mxu0 %v631
        %762 = vmatpush.bf16.msra.mxu0 %v627
        %763 = vmatmul.bf16.gmra.mxu0 %v359
        %v764 = vpop.f32.mrf.mxu0
        %v765 = vadd.f32 %v427, %v764
        %v766 = vpop.f32.mrf.mxu0
        %v767 = vadd.f32 %v427, %v766
        %768 = vdwg.mxu0
        %769 = vmatpush.bf16.msra.mxu0 %v687
        %770 = vmatpush.bf16.msra.mxu0 %v683
        %771 = vmatpush.bf16.msra.mxu0 %v679
        %772 = vmatpush.bf16.msra.mxu0 %v675
        %773 = vmatpush.bf16.msra.mxu0 %v671
        %774 = vmatpush.bf16.msra.mxu0 %v667
        %775 = vmatpush.bf16.msra.mxu0 %v663
        %776 = vmatpush.bf16.msra.mxu0 %v659
        %777 = vmatmul.bf16.gmra.mxu0 %v360
        %v778 = vpop.f32.mrf.mxu0
        %v779 = vadd.f32 %v765, %v778
        %v780 = vpop.f32.mrf.mxu0
        %v781 = vadd.f32 %v767, %v780
        %782 = vdwg.mxu0
        %783 = vmatpush.bf16.msra.mxu0 %v656
        %784 = vmatpush.bf16.msra.mxu0 %v652
        %785 = vmatpush.bf16.msra.mxu0 %v648
        %786 = vmatpush.bf16.msra.mxu0 %v644
        %787 = vmatpush.bf16.msra.mxu0 %v640
        %788 = vmatpush.bf16.msra.mxu0 %v636
        %789 = vmatpush.bf16.msra.mxu0 %v632
        %790 = vmatpush.bf16.msra.mxu0 %v628
        %791 = vmatmul.bf16.gmra.mxu0 %v359
        %v792 = vpop.f32.mrf.mxu0
        %v793 = vadd.f32 %v428, %v792
        %v794 = vpop.f32.mrf.mxu0
        %v795 = vadd.f32 %v428, %v794
        %796 = vdwg.mxu0
        %797 = vmatpush.bf16.msra.mxu0 %v688
        %798 = vmatpush.bf16.msra.mxu0 %v684
        %799 = vmatpush.bf16.msra.mxu0 %v680
        %800 = vmatpush.bf16.msra.mxu0 %v676
        %801 = vmatpush.bf16.msra.mxu0 %v672
        %802 = vmatpush.bf16.msra.mxu0 %v668
        %803 = vmatpush.bf16.msra.mxu0 %v664
        %804 = vmatpush.bf16.msra.mxu0 %v660
        %805 = vmatmul.bf16.gmra.mxu0 %v360
        %v806 = vpop.f32.mrf.mxu0
        %v807 = vadd.f32 %v793, %v806
        %v808 = vpop.f32.mrf.mxu0
        %v809 = vadd.f32 %v795, %v808
        %810 = vdwg.mxu0
        %811 = vmatpush.bf16.msra.mxu0 %v657
        %812 = vmatpush.bf16.msra.mxu0 %v653
        %813 = vmatpush.bf16.msra.mxu0 %v649
        %814 = vmatpush.bf16.msra.mxu0 %v645
        %815 = vmatpush.bf16.msra.mxu0 %v641
        %816 = vmatpush.bf16.msra.mxu0 %v637
        %817 = vmatpush.bf16.msra.mxu0 %v633
        %818 = vmatpush.bf16.msra.mxu0 %v629
        %819 = vmatmul.bf16.gmra.mxu0 %v359
        %v820 = vpop.f32.mrf.mxu0
        %v821 = vadd.f32 %v429, %v820
        %v822 = vpop.f32.mrf.mxu0
        %v823 = vadd.f32 %v429, %v822
        %824 = vdwg.mxu0
        %825 = vmatpush.bf16.msra.mxu0 %v689
        %826 = vmatpush.bf16.msra.mxu0 %v685
        %827 = vmatpush.bf16.msra.mxu0 %v681
        %828 = vmatpush.bf16.msra.mxu0 %v677
        %829 = vmatpush.bf16.msra.mxu0 %v673
        %830 = vmatpush.bf16.msra.mxu0 %v669
        %831 = vmatpush.bf16.msra.mxu0 %v665
        %832 = vmatpush.bf16.msra.mxu0 %v661
        %833 = vmatmul.bf16.gmra.mxu0 %v360
        %v834 = vpop.f32.mrf.mxu0
        %v835 = vadd.f32 %v821, %v834
        %v836 = vpop.f32.mrf.mxu0
        %v837 = vadd.f32 %v823, %v836
        %838 = vdwg.mxu0
        %839 = vmatpush.bf16.msra.mxu0 %v658
        %840 = vmatpush.bf16.msra.mxu0 %v654
        %841 = vmatpush.bf16.msra.mxu0 %v650
        %842 = vmatpush.bf16.msra.mxu0 %v646
        %843 = vmatpush.bf16.msra.mxu0 %v642
        %844 = vmatpush.bf16.msra.mxu0 %v638
        %845 = vmatpush.bf16.msra.mxu0 %v634
        %846 = vmatpush.bf16.msra.mxu0 %v630
        %847 = vmatmul.bf16.gmra.mxu0 %v359
        %v848 = vpop.f32.mrf.mxu0
        %v849 = vadd.f32 %v430, %v848
        %v850 = vpop.f32.mrf.mxu0
        %v851 = vadd.f32 %v430, %v850
        %852 = vdwg.mxu0
        %853 = vmatpush.bf16.msra.mxu0 %v690
        %854 = vmatpush.bf16.msra.mxu0 %v686
        %855 = vmatpush.bf16.msra.mxu0 %v682
        %856 = vmatpush.bf16.msra.mxu0 %v678
        %857 = vmatpush.bf16.msra.mxu0 %v674
        %858 = vmatpush.bf16.msra.mxu0 %v670
        %859 = vmatpush.bf16.msra.mxu0 %v666
        %860 = vmatpush.bf16.msra.mxu0 %v662
        %861 = vmatmul.bf16.gmra.mxu0 %v360
        %v862 = vpop.f32.mrf.mxu0
        %v863 = vadd.f32 %v849, %v862
        %v864 = vpop.f32.mrf.mxu0
        %v865 = vadd.f32 %v851, %v864
        %866 = vdwg.mxu0
        %v867 = vmul.f32 %v779, 0.5
        %v868 = vmul.f32 %v807, 0.5
        %v869 = vmul.f32 %v835, 0.5
        %v870 = vmul.f32 %v863, 0.5
        %v871 = vmul.f32 %v781, 0.5
        %v872 = vmul.f32 %v809, 0.5
        %v873 = vmul.f32 %v837, 0.5
        %v874 = vmul.f32 %v865, 0.5
        %v875 = vmul.f32 %v779, 0.044715
        %v876 = vmul.f32 %v807, 0.044715
        %v877 = vmul.f32 %v835, 0.044715
        %v878 = vmul.f32 %v863, 0.044715
        %v879 = vmul.f32 %v781, 0.044715
        %v880 = vmul.f32 %v809, 0.044715
        %v881 = vmul.f32 %v837, 0.044715
        %v882 = vmul.f32 %v865, 0.044715
        %v883 = vmul.f32 %v875, %v779
        %v884 = vmul.f32 %v876, %v807
        %v885 = vmul.f32 %v877, %v835
        %v886 = vmul.f32 %v878, %v863
        %v887 = vmul.f32 %v879, %v781
        %v888 = vmul.f32 %v880, %v809
        %v889 = vmul.f32 %v881, %v837
        %v890 = vmul.f32 %v882, %v865
        %v891 = vmul.f32 %v883, %v779
        %v892 = vmul.f32 %v884, %v807
        %v893 = vmul.f32 %v885, %v835
        %v894 = vmul.f32 %v886, %v863
        %v895 = vmul.f32 %v887, %v781
        %v896 = vmul.f32 %v888, %v809
        %v897 = vmul.f32 %v889, %v837
        %v898 = vmul.f32 %v890, %v865
        %v899 = vadd.f32 %v779, %v891
        %v900 = vadd.f32 %v807, %v892
        %v901 = vadd.f32 %v835, %v893
        %v902 = vadd.f32 %v863, %v894
        %v903 = vadd.f32 %v781, %v895
        %v904 = vadd.f32 %v809, %v896
        %v905 = vadd.f32 %v837, %v897
        %v906 = vadd.f32 %v865, %v898
        %v907 = vmul.f32 %v899, 0.7978846
        %v908 = vmul.f32 %v900, 0.7978846
        %v909 = vmul.f32 %v901, 0.7978846
        %v910 = vmul.f32 %v902, 0.7978846
        %v911 = vmul.f32 %v903, 0.7978846
        %v912 = vmul.f32 %v904, 0.7978846
        %v913 = vmul.f32 %v905, 0.7978846
        %v914 = vmul.f32 %v906, 0.7978846
        %v915 = vtanh.pop %v907
        %v916 = vtanh.pop %v908
        %v917 = vtanh.pop %v909
        %v918 = vtanh.pop %v910
        %v919 = vtanh.pop %v911
        %v920 = vtanh.pop %v912
        %v921 = vtanh.pop %v913
        %v922 = vtanh.pop %v914
        %v923 = vadd.f32 %v915, 1.0
        %v924 = vadd.f32 %v916, 1.0
        %v925 = vadd.f32 %v917, 1.0
        %v926 = vadd.f32 %v918, 1.0
        %v927 = vadd.f32 %v919, 1.0
        %v928 = vadd.f32 %v920, 1.0
        %v929 = vadd.f32 %v921, 1.0
        %v930 = vadd.f32 %v922, 1.0
        %v931 = vmul.f32 %v867, %v923
        %v932 = vmul.f32 %v868, %v924
        %v933 = vmul.f32 %v869, %v925
        %v934 = vmul.f32 %v870, %v926
        %v935 = vmul.f32 %v871, %v927
        %v936 = vmul.f32 %v872, %v928
        %v937 = vmul.f32 %v873, %v929
        %v938 = vmul.f32 %v874, %v930
        %v939 = vpack.c.bf16 %v935, %v931
        %v940 = vpack.c.bf16 %v936, %v932
        %v941 = vpack.c.bf16 %v937, %v933
        %v942 = vpack.c.bf16 %v938, %v934
        %v943 = vld [vmem:[#allocation8] sm:$0xff]
        %v944 = vld [vmem:[#allocation8 + $0x8] sm:$0xff]
        %v945 = vld [vmem:[#allocation8 + $0x10] sm:$0xff]
        %v946 = vld [vmem:[#allocation8 + $0x18] sm:$0xff]
        %v947 = vld [vmem:[#allocation8 + $0x20] sm:$0xff]
        %v948 = vld [vmem:[#allocation8 + $0x28] sm:$0xff]
        %v949 = vld [vmem:[#allocation8 + $0x30] sm:$0xff]
        %v950 = vld [vmem:[#allocation8 + $0x38] sm:$0xff]
        %v951 = vld [vmem:[#allocation8 + $0x40] sm:$0xff]
        %v952 = vld [vmem:[#allocation8 + $0x48] sm:$0xff]
        %v953 = vld [vmem:[#allocation8 + $0x50] sm:$0xff]
        %v954 = vld [vmem:[#allocation8 + $0x58] sm:$0xff]
        %v955 = vld [vmem:[#allocation8 + $0x60] sm:$0xff]
        %v956 = vld [vmem:[#allocation8 + $0x68] sm:$0xff]
        %v957 = vld [vmem:[#allocation8 + $0x70] sm:$0xff]
        %v958 = vld [vmem:[#allocation8 + $0x78] sm:$0xff]
        %v959 = vld [vmem:[#allocation8 + $0x80] sm:$0xff]
        %v960 = vld [vmem:[#allocation8 + $0x88] sm:$0xff]
        %v961 = vld [vmem:[#allocation8 + $0x90] sm:$0xff]
        %v962 = vld [vmem:[#allocation8 + $0x98] sm:$0xff]
        %v963 = vld [vmem:[#allocation8 + $0xa0] sm:$0xff]
        %v964 = vld [vmem:[#allocation8 + $0xa8] sm:$0xff]
        %v965 = vld [vmem:[#allocation8 + $0xb0] sm:$0xff]
        %v966 = vld [vmem:[#allocation8 + $0xb8] sm:$0xff]
        %v967 = vld [vmem:[#allocation8 + $0xc0] sm:$0xff]
        %v968 = vld [vmem:[#allocation8 + $0xc8] sm:$0xff]
        %v969 = vld [vmem:[#allocation8 + $0xd0] sm:$0xff]
        %v970 = vld [vmem:[#allocation8 + $0xd8] sm:$0xff]
        %v971 = vld [vmem:[#allocation8 + $0xe0] sm:$0xff]
        %v972 = vld [vmem:[#allocation8 + $0xe8] sm:$0xff]
        %v973 = vld [vmem:[#allocation8 + $0xf0] sm:$0xff]
        %v974 = vld [vmem:[#allocation8 + $0xf8] sm:$0xff]
        %v975 = vld [vmem:[#allocation8 + $0x100] sm:$0xff]
        %v976 = vld [vmem:[#allocation8 + $0x108] sm:$0xff]
        %v977 = vld [vmem:[#allocation8 + $0x110] sm:$0xff]
        %v978 = vld [vmem:[#allocation8 + $0x118] sm:$0xff]
        %v979 = vld [vmem:[#allocation8 + $0x120] sm:$0xff]
        %v980 = vld [vmem:[#allocation8 + $0x128] sm:$0xff]
        %v981 = vld [vmem:[#allocation8 + $0x130] sm:$0xff]
        %v982 = vld [vmem:[#allocation8 + $0x138] sm:$0xff]
        %v983 = vld [vmem:[#allocation8 + $0x140] sm:$0xff]
        %v984 = vld [vmem:[#allocation8 + $0x148] sm:$0xff]
        %v985 = vld [vmem:[#allocation8 + $0x150] sm:$0xff]
        %v986 = vld [vmem:[#allocation8 + $0x158] sm:$0xff]
        %v987 = vld [vmem:[#allocation8 + $0x160] sm:$0xff]
        %v988 = vld [vmem:[#allocation8 + $0x168] sm:$0xff]
        %v989 = vld [vmem:[#allocation8 + $0x170] sm:$0xff]
        %v990 = vld [vmem:[#allocation8 + $0x178] sm:$0xff]
        %v991 = vld [vmem:[#allocation8 + $0x180] sm:$0xff]
        %v992 = vld [vmem:[#allocation8 + $0x188] sm:$0xff]
        %v993 = vld [vmem:[#allocation8 + $0x190] sm:$0xff]
        %v994 = vld [vmem:[#allocation8 + $0x198] sm:$0xff]
        %v995 = vld [vmem:[#allocation8 + $0x1a0] sm:$0xff]
        %v996 = vld [vmem:[#allocation8 + $0x1a8] sm:$0xff]
        %v997 = vld [vmem:[#allocation8 + $0x1b0] sm:$0xff]
        %v998 = vld [vmem:[#allocation8 + $0x1b8] sm:$0xff]
        %v999 = vld [vmem:[#allocation8 + $0x1c0] sm:$0xff]
        %v1000 = vld [vmem:[#allocation8 + $0x1c8] sm:$0xff]
        %v1001 = vld [vmem:[#allocation8 + $0x1d0] sm:$0xff]
        %v1002 = vld [vmem:[#allocation8 + $0x1d8] sm:$0xff]
        %v1003 = vld [vmem:[#allocation8 + $0x1e0] sm:$0xff]
        %v1004 = vld [vmem:[#allocation8 + $0x1e8] sm:$0xff]
        %v1005 = vld [vmem:[#allocation8 + $0x1f0] sm:$0xff]
        %v1006 = vld [vmem:[#allocation8 + $0x1f8] sm:$0xff]
        %v1007 = vld [vmem:[%s4] sm:$0x3]
        %v1009 = vperm.slane %v1007, 0
        %v1010 = vperm.slane %v1007, 1
        %v1077 = vunpack.c.l.b16 %v943
        %v1078 = vunpack.c.h.b16 %v943
        %v1079 = vunpack.c.l.b16 %v944
        %v1080 = vunpack.c.h.b16 %v944
        %v1081 = vunpack.c.l.b16 %v945
        %v1082 = vunpack.c.h.b16 %v945
        %v1083 = vunpack.c.l.b16 %v946
        %v1084 = vunpack.c.h.b16 %v946
        %v1085 = vunpack.c.l.b16 %v947
        %v1086 = vunpack.c.h.b16 %v947
        %v1087 = vunpack.c.l.b16 %v948
        %v1088 = vunpack.c.h.b16 %v948
        %v1089 = vunpack.c.l.b16 %v949
        %v1090 = vunpack.c.h.b16 %v949
        %v1091 = vunpack.c.l.b16 %v950
        %v1092 = vunpack.c.h.b16 %v950
        %v1093 = vunpack.c.l.b16 %v951
        %v1094 = vunpack.c.h.b16 %v951
        %v1095 = vunpack.c.l.b16 %v952
        %v1096 = vunpack.c.h.b16 %v952
        %v1097 = vunpack.c.l.b16 %v953
        %v1098 = vunpack.c.h.b16 %v953
        %v1099 = vunpack.c.l.b16 %v954
        %v1100 = vunpack.c.h.b16 %v954
        %v1101 = vunpack.c.l.b16 %v955
        %v1102 = vunpack.c.h.b16 %v955
        %v1103 = vunpack.c.l.b16 %v956
        %v1104 = vunpack.c.h.b16 %v956
        %v1105 = vunpack.c.l.b16 %v957
        %v1106 = vunpack.c.h.b16 %v957
        %v1107 = vunpack.c.l.b16 %v958
        %v1108 = vunpack.c.h.b16 %v958
        %v1109 = vunpack.c.l.b16 %v959
        %v1110 = vunpack.c.h.b16 %v959
        %v1111 = vunpack.c.l.b16 %v960
        %v1112 = vunpack.c.h.b16 %v960
        %v1113 = vunpack.c.l.b16 %v961
        %v1114 = vunpack.c.h.b16 %v961
        %v1115 = vunpack.c.l.b16 %v962
        %v1116 = vunpack.c.h.b16 %v962
        %v1117 = vunpack.c.l.b16 %v963
        %v1118 = vunpack.c.h.b16 %v963
        %v1119 = vunpack.c.l.b16 %v964
        %v1120 = vunpack.c.h.b16 %v964
        %v1121 = vunpack.c.l.b16 %v965
        %v1122 = vunpack.c.h.b16 %v965
        %v1123 = vunpack.c.l.b16 %v966
        %v1124 = vunpack.c.h.b16 %v966
        %v1125 = vunpack.c.l.b16 %v967
        %v1126 = vunpack.c.h.b16 %v967
        %v1127 = vunpack.c.l.b16 %v968
        %v1128 = vunpack.c.h.b16 %v968
        %v1129 = vunpack.c.l.b16 %v969
        %v1130 = vunpack.c.h.b16 %v969
        %v1131 = vunpack.c.l.b16 %v970
        %v1132 = vunpack.c.h.b16 %v970
        %v1133 = vunpack.c.l.b16 %v971
        %v1134 = vunpack.c.h.b16 %v971
        %v1135 = vunpack.c.l.b16 %v972
        %v1136 = vunpack.c.h.b16 %v972
        %v1137 = vunpack.c.l.b16 %v973
        %v1138 = vunpack.c.h.b16 %v973
        %v1139 = vunpack.c.l.b16 %v974
        %v1140 = vunpack.c.h.b16 %v974
        %v1141 = vunpack.c.l.b16 %v975
        %v1142 = vunpack.c.h.b16 %v975
        %v1143 = vunpack.c.l.b16 %v976
        %v1144 = vunpack.c.h.b16 %v976
        %v1145 = vunpack.c.l.b16 %v977
        %v1146 = vunpack.c.h.b16 %v977
        %v1147 = vunpack.c.l.b16 %v978
        %v1148 = vunpack.c.h.b16 %v978
        %v1149 = vunpack.c.l.b16 %v979
        %v1150 = vunpack.c.h.b16 %v979
        %v1151 = vunpack.c.l.b16 %v980
        %v1152 = vunpack.c.h.b16 %v980
        %v1153 = vunpack.c.l.b16 %v981
        %v1154 = vunpack.c.h.b16 %v981
        %v1155 = vunpack.c.l.b16 %v982
        %v1156 = vunpack.c.h.b16 %v982
        %v1157 = vunpack.c.l.b16 %v983
        %v1158 = vunpack.c.h.b16 %v983
        %v1159 = vunpack.c.l.b16 %v984
        %v1160 = vunpack.c.h.b16 %v984
        %v1161 = vunpack.c.l.b16 %v985
        %v1162 = vunpack.c.h.b16 %v985
        %v1163 = vunpack.c.l.b16 %v986
        %v1164 = vunpack.c.h.b16 %v986
        %v1165 = vunpack.c.l.b16 %v987
        %v1166 = vunpack.c.h.b16 %v987
        %v1167 = vunpack.c.l.b16 %v988
        %v1168 = vunpack.c.h.b16 %v988
        %v1169 = vunpack.c.l.b16 %v989
        %v1170 = vunpack.c.h.b16 %v989
        %v1171 = vunpack.c.l.b16 %v990
        %v1172 = vunpack.c.h.b16 %v990
        %v1173 = vunpack.c.l.b16 %v991
        %v1174 = vunpack.c.h.b16 %v991
        %v1175 = vunpack.c.l.b16 %v992
        %v1176 = vunpack.c.h.b16 %v992
        %v1177 = vunpack.c.l.b16 %v993
        %v1178 = vunpack.c.h.b16 %v993
        %v1179 = vunpack.c.l.b16 %v994
        %v1180 = vunpack.c.h.b16 %v994
        %v1181 = vunpack.c.l.b16 %v995
        %v1182 = vunpack.c.h.b16 %v995
        %v1183 = vunpack.c.l.b16 %v996
        %v1184 = vunpack.c.h.b16 %v996
        %v1185 = vunpack.c.l.b16 %v997
        %v1186 = vunpack.c.h.b16 %v997
        %v1187 = vunpack.c.l.b16 %v998
        %v1188 = vunpack.c.h.b16 %v998
        %v1189 = vunpack.c.l.b16 %v999
        %v1190 = vunpack.c.h.b16 %v999
        %v1191 = vunpack.c.l.b16 %v1000
        %v1192 = vunpack.c.h.b16 %v1000
        %v1193 = vunpack.c.l.b16 %v1001
        %v1194 = vunpack.c.h.b16 %v1001
        %v1195 = vunpack.c.l.b16 %v1002
        %v1196 = vunpack.c.h.b16 %v1002
        %v1197 = vunpack.c.l.b16 %v1003
        %v1198 = vunpack.c.h.b16 %v1003
        %v1199 = vunpack.c.l.b16 %v1004
        %v1200 = vunpack.c.h.b16 %v1004
        %v1201 = vunpack.c.l.b16 %v1005
        %v1202 = vunpack.c.h.b16 %v1005
        %v1203 = vunpack.c.l.b16 %v1006
        %v1204 = vunpack.c.h.b16 %v1006
        %v1205 = vpack.c.b16 %v1079, %v1077
        %v1206 = vpack.c.b16 %v1080, %v1078
        %v1207 = vpack.c.b16 %v1083, %v1081
        %v1208 = vpack.c.b16 %v1084, %v1082
        %v1209 = vpack.c.b16 %v1087, %v1085
        %v1210 = vpack.c.b16 %v1088, %v1086
        %v1211 = vpack.c.b16 %v1091, %v1089
        %v1212 = vpack.c.b16 %v1092, %v1090
        %v1213 = vpack.c.b16 %v1095, %v1093
        %v1214 = vpack.c.b16 %v1096, %v1094
        %v1215 = vpack.c.b16 %v1099, %v1097
        %v1216 = vpack.c.b16 %v1100, %v1098
        %v1217 = vpack.c.b16 %v1103, %v1101
        %v1218 = vpack.c.b16 %v1104, %v1102
        %v1219 = vpack.c.b16 %v1107, %v1105
        %v1220 = vpack.c.b16 %v1108, %v1106
        %v1221 = vpack.c.b16 %v1111, %v1109
        %v1222 = vpack.c.b16 %v1112, %v1110
        %v1223 = vpack.c.b16 %v1115, %v1113
        %v1224 = vpack.c.b16 %v1116, %v1114
        %v1225 = vpack.c.b16 %v1119, %v1117
        %v1226 = vpack.c.b16 %v1120, %v1118
        %v1227 = vpack.c.b16 %v1123, %v1121
        %v1228 = vpack.c.b16 %v1124, %v1122
        %v1229 = vpack.c.b16 %v1127, %v1125
        %v1230 = vpack.c.b16 %v1128, %v1126
        %v1231 = vpack.c.b16 %v1131, %v1129
        %v1232 = vpack.c.b16 %v1132, %v1130
        %v1233 = vpack.c.b16 %v1135, %v1133
        %v1234 = vpack.c.b16 %v1136, %v1134
        %v1235 = vpack.c.b16 %v1139, %v1137
        %v1236 = vpack.c.b16 %v1140, %v1138
        %v1237 = vpack.c.b16 %v1143, %v1141
        %v1238 = vpack.c.b16 %v1144, %v1142
        %v1239 = vpack.c.b16 %v1147, %v1145
        %v1240 = vpack.c.b16 %v1148, %v1146
        %v1241 = vpack.c.b16 %v1151, %v1149
        %v1242 = vpack.c.b16 %v1152, %v1150
        %v1243 = vpack.c.b16 %v1155, %v1153
        %v1244 = vpack.c.b16 %v1156, %v1154
        %v1245 = vpack.c.b16 %v1159, %v1157
        %v1246 = vpack.c.b16 %v1160, %v1158
        %v1247 = vpack.c.b16 %v1163, %v1161
        %v1248 = vpack.c.b16 %v1164, %v1162
        %v1249 = vpack.c.b16 %v1167, %v1165
        %v1250 = vpack.c.b16 %v1168, %v1166
        %v1251 = vpack.c.b16 %v1171, %v1169
        %v1252 = vpack.c.b16 %v1172, %v1170
        %v1253 = vpack.c.b16 %v1175, %v1173
        %v1254 = vpack.c.b16 %v1176, %v1174
        %v1255 = vpack.c.b16 %v1179, %v1177
        %v1256 = vpack.c.b16 %v1180, %v1178
        %v1257 = vpack.c.b16 %v1183, %v1181
        %v1258 = vpack.c.b16 %v1184, %v1182
        %v1259 = vpack.c.b16 %v1187, %v1185
        %v1260 = vpack.c.b16 %v1188, %v1186
        %v1261 = vpack.c.b16 %v1191, %v1189
        %v1262 = vpack.c.b16 %v1192, %v1190
        %v1263 = vpack.c.b16 %v1195, %v1193
        %v1264 = vpack.c.b16 %v1196, %v1194
        %v1265 = vpack.c.b16 %v1199, %v1197
        %v1266 = vpack.c.b16 %v1200, %v1198
        %v1267 = vpack.c.b16 %v1203, %v1201
        %v1268 = vpack.c.b16 %v1204, %v1202
        %1333 = vmatpush.bf16.msra.mxu0 %v1219
        %1334 = vmatpush.bf16.msra.mxu0 %v1217
        %1335 = vmatpush.bf16.msra.mxu0 %v1215
        %1336 = vmatpush.bf16.msra.mxu0 %v1213
        %1337 = vmatpush.bf16.msra.mxu0 %v1211
        %1338 = vmatpush.bf16.msra.mxu0 %v1209
        %1339 = vmatpush.bf16.msra.mxu0 %v1207
        %1340 = vmatpush.bf16.msra.mxu0 %v1205
        %1341 = vmatmul.bf16.gmra.mxu0 %v939
        %v1342 = vpop.f32.mrf.mxu0
        %v1343 = vadd.f32 %v1009, %v1342
        %v1344 = vpop.f32.mrf.mxu0
        %v1345 = vadd.f32 %v1009, %v1344
        %1346 = vdwg.mxu0
        %1347 = vmatpush.bf16.msra.mxu0 %v1235
        %1348 = vmatpush.bf16.msra.mxu0 %v1233
        %1349 = vmatpush.bf16.msra.mxu0 %v1231
        %1350 = vmatpush.bf16.msra.mxu0 %v1229
        %1351 = vmatpush.bf16.msra.mxu0 %v1227
        %1352 = vmatpush.bf16.msra.mxu0 %v1225
        %1353 = vmatpush.bf16.msra.mxu0 %v1223
        %1354 = vmatpush.bf16.msra.mxu0 %v1221
        %1355 = vmatmul.bf16.gmra.mxu0 %v940
        %v1356 = vpop.f32.mrf.mxu0
        %v1357 = vadd.f32 %v1343, %v1356
        %v1358 = vpop.f32.mrf.mxu0
        %v1359 = vadd.f32 %v1345, %v1358
        %1360 = vdwg.mxu0
        %1361 = vmatpush.bf16.msra.mxu0 %v1251
        %1362 = vmatpush.bf16.msra.mxu0 %v1249
        %1363 = vmatpush.bf16.msra.mxu0 %v1247
        %1364 = vmatpush.bf16.msra.mxu0 %v1245
        %1365 = vmatpush.bf16.msra.mxu0 %v1243
        %1366 = vmatpush.bf16.msra.mxu0 %v1241
        %1367 = vmatpush.bf16.msra.mxu0 %v1239
        %1368 = vmatpush.bf16.msra.mxu0 %v1237
        %1369 = vmatmul.bf16.gmra.mxu0 %v941
        %v1370 = vpop.f32.mrf.mxu0
        %v1371 = vadd.f32 %v1357, %v1370
        %v1372 = vpop.f32.mrf.mxu0
        %v1373 = vadd.f32 %v1359, %v1372
        %1374 = vdwg.mxu0
        %1375 = vmatpush.bf16.msra.mxu0 %v1267
        %1376 = vmatpush.bf16.msra.mxu0 %v1265
        %1377 = vmatpush.bf16.msra.mxu0 %v1263
        %1378 = vmatpush.bf16.msra.mxu0 %v1261
        %1379 = vmatpush.bf16.msra.mxu0 %v1259
        %1380 = vmatpush.bf16.msra.mxu0 %v1257
        %1381 = vmatpush.bf16.msra.mxu0 %v1255
        %1382 = vmatpush.bf16.msra.mxu0 %v1253
        %1383 = vmatmul.bf16.gmra.mxu0 %v942
        %v1384 = vpop.f32.mrf.mxu0
        %v1385 = vadd.f32 %v1371, %v1384
        %v1386 = vpop.f32.mrf.mxu0
        %v1387 = vadd.f32 %v1373, %v1386
        %1388 = vdwg.mxu0
        %1389 = vmatpush.bf16.msra.mxu0 %v1220
        %1390 = vmatpush.bf16.msra.mxu0 %v1218
        %1391 = vmatpush.bf16.msra.mxu0 %v1216
        %1392 = vmatpush.bf16.msra.mxu0 %v1214
        %1393 = vmatpush.bf16.msra.mxu0 %v1212
        %1394 = vmatpush.bf16.msra.mxu0 %v1210
        %1395 = vmatpush.bf16.msra.mxu0 %v1208
        %1396 = vmatpush.bf16.msra.mxu0 %v1206
        %1397 = vmatmul.bf16.gmra.mxu0 %v939
        %v1398 = vpop.f32.mrf.mxu0
        %v1399 = vadd.f32 %v1010, %v1398
        %v1400 = vpop.f32.mrf.mxu0
        %v1401 = vadd.f32 %v1010, %v1400
        %1402 = vdwg.mxu0
        %1403 = vmatpush.bf16.msra.mxu0 %v1236
        %1404 = vmatpush.bf16.msra.mxu0 %v1234
        %1405 = vmatpush.bf16.msra.mxu0 %v1232
        %1406 = vmatpush.bf16.msra.mxu0 %v1230
        %1407 = vmatpush.bf16.msra.mxu0 %v1228
        %1408 = vmatpush.bf16.msra.mxu0 %v1226
        %1409 = vmatpush.bf16.msra.mxu0 %v1224
        %1410 = vmatpush.bf16.msra.mxu0 %v1222
        %1411 = vmatmul.bf16.gmra.mxu0 %v940
        %v1412 = vpop.f32.mrf.mxu0
        %v1413 = vadd.f32 %v1399, %v1412
        %v1414 = vpop.f32.mrf.mxu0
        %v1415 = vadd.f32 %v1401, %v1414
        %1416 = vdwg.mxu0
        %1417 = vmatpush.bf16.msra.mxu0 %v1252
        %1418 = vmatpush.bf16.msra.mxu0 %v1250
        %1419 = vmatpush.bf16.msra.mxu0 %v1248
        %1420 = vmatpush.bf16.msra.mxu0 %v1246
        %1421 = vmatpush.bf16.msra.mxu0 %v1244
        %1422 = vmatpush.bf16.msra.mxu0 %v1242
        %1423 = vmatpush.bf16.msra.mxu0 %v1240
        %1424 = vmatpush.bf16.msra.mxu0 %v1238
        %1425 = vmatmul.bf16.gmra.mxu0 %v941
        %v1426 = vpop.f32.mrf.mxu0
        %v1427 = vadd.f32 %v1413, %v1426
        %v1428 = vpop.f32.mrf.mxu0
        %v1429 = vadd.f32 %v1415, %v1428
        %1430 = vdwg.mxu0
        %1431 = vmatpush.bf16.msra.mxu0 %v1268
        %1432 = vmatpush.bf16.msra.mxu0 %v1266
        %1433 = vmatpush.bf16.msra.mxu0 %v1264
        %1434 = vmatpush.bf16.msra.mxu0 %v1262
        %1435 = vmatpush.bf16.msra.mxu0 %v1260
        %1436 = vmatpush.bf16.msra.mxu0 %v1258
        %1437 = vmatpush.bf16.msra.mxu0 %v1256
        %1438 = vmatpush.bf16.msra.mxu0 %v1254
        %1439 = vmatmul.bf16.gmra.mxu0 %v942
        %v1440 = vpop.f32.mrf.mxu0
        %v1441 = vadd.f32 %v1427, %v1440
        %v1442 = vpop.f32.mrf.mxu0
        %v1443 = vadd.f32 %v1429, %v1442
        %1444 = vdwg.mxu0
        %1445 = vst [vmem:[%s293] sm:$0xff] %v1385
        %1446 = vst [vmem:[%s293 + $0x8] sm:$0xff] %v1441
        %1447 = vst [vmem:[%s293 + $0x10] sm:$0xff] %v1387
        %1448 = vst [vmem:[%s293 + $0x18] sm:$0xff] %v1443
        %s1449 = sand.u32 %s142, 1
        %s1450 = scalar_lea.sflag [#allocation4], %s1449
        %s1451 = sand.u32 %s142, 1
        %s1452 = smul.addr %s1451, 32
        %s1453 = scalar_lea.vmem [#allocation10], %s1452
        // Predicated region
        $region57: #{tpu_custom_call.1} parent=39 // pred_check
          %p1454 = pneg %p152
        $region58: #{tpu_custom_call.1} parent=39 // pred_check_branch
          %1456 = sbr.rel (%p1454) target = $region60
        $region59: #{tpu_custom_call.1} parent=39 // pred_region
          %s1457 = smul.u32 2, %s24
          %1459 = vsyncadd %s1450, 0
          %s1460 = smul.addr %s1457, 2
          %s1461 = smul.addr %s1460, 8
          %s1462 = scalar_lea.hbm %s5, %s1461
          %s1463 = sshll.u32 %s1453, 4
          %s1464 = int_to_ptr.vmem [resolvable:$true] %s1463
          %s1465 = sshll.u32 %s1462, 4
          %s1466 = int_to_ptr.hbm [resolvable:$true] %s1465
          %1471 = dma.vmem_to_hbm [thread:$0]  %s1464, 512, %s1466, %s1450, 256, 256, 16
        $region60: #{tpu_custom_call.1} parent=39 // pred_fallthru
          _
      $region40: #{tpu_custom_call.1} parent=5 // pred_fallthru
        _
      %p1472 = scmp.le.s32.totalorder 2, %s19
      // Predicated region
      $region61: #{tpu_custom_call.1} parent=5 // pred_check
        %p1473 = pneg %p1472
      $region62: #{tpu_custom_call.1} parent=5 // pred_check_branch
        %1475 = sbr.rel (%p1473) target = $region64
      $region63: #{tpu_custom_call.1} parent=5 // pred_region
        %s1476 = ssub.s32 %s19, 2
        // Predicated region
        $region65: #{tpu_custom_call.1} parent=63 // pred_check
          %p1477 = pneg %p158
        $region66: #{tpu_custom_call.1} parent=63 // pred_check_branch
          %1479 = sbr.rel (%p1477) target = $region68
        $region67: #{tpu_custom_call.1} parent=63 // pred_region
          %s1480 = sand.u32 %s143, 1
          %s1481 = scalar_lea.sflag [#allocation4], %s1480
          %s1482 = sand.u32 %s143, 1
          %s1483 = smul.addr %s1482, 32
          %s1484 = scalar_lea.vmem [#allocation10], %s1483
          %1486 = dma.done %s1481, 512
        $region68: #{tpu_custom_call.1} parent=63 // pred_fallthru
          _
      $region64: #{tpu_custom_call.1} parent=5 // pred_fallthru
        _
    $region6: #{tpu_custom_call.1} parent=1 // loop_footer
      %s23 = sadd.s32 1, %s19
    $region7: #{tpu_custom_call.1} parent=1 // loop_footer_branch
      %18 = sbr.rel target = $region3
    $region8: #{tpu_custom_call.1} parent=1 // loop_exit
      _
    %1487 = vsyncpa [#allocation3], 1
    %s1488 = scalar_lea.sflag [#allocation3], 1
    %1489 = vsyncpa %s1488, 1
    %1490 = vsyncpa [#allocation6], 1
    %1491 = vsyncpa [#allocation9], 1
    %1492 = vsyncpa [#allocation4], 1
    %s1493 = scalar_lea.sflag [#allocation4], 1
    %1494 = vsyncpa %s1493, 1

</llo_original>
